<compile_context>
chip_gen: v6e
topology: v6e:2x2x1
jax: 0.10.0
libtpu: 0.0.40
codegen_flags: <defaults>
</compile_context>

<pallas_src>
import jax
import jax.numpy as jnp
from jax import lax
from jax.experimental import pallas as pl
from jax.experimental.pallas import tpu as pltpu


def _tpu_generation():
    """Best-effort TPU generation from device_kind; None if undetermined."""
    try:
        kind = jax.devices()[0].device_kind.lower()
    except Exception:
        return None
    for g in (7, 6, 5, 4, 3, 2):
        if (f"v{g}" in kind) or (f"tpu{g}" in kind):
            return g
    return None


def _pick_tile_j(n_pad, max_tile):
    """Largest multiple of 128 that divides n_pad and is <= max_tile."""
    if n_pad <= max_tile:
        return n_pad
    best = 128
    tj = 128
    while tj <= max_tile:
        if n_pad % tj == 0:
            best = tj
        tj += 128
    return best


def _vmem_limit_bytes(c, ic_pad, n_pad, tj, exp_bytes, cap):
    f32 = 4
    est = 0
    est += 2 * c * n_pad * f32                       # x slab (double buffered)
    est += 2 * c * n_pad * f32                       # output block (double buffered)
    est += 2 * (3 * ic_pad * c + 3 * ic_pad + c * ic_pad + c) * f32  # weights
    est += ic_pad * n_pad * 2                        # theta scratch (bf16)
    est += ic_pad * n_pad * f32                      # y accumulator (f32)
    est += n_pad * tj * (2 * f32 + 2 * exp_bytes)    # f / (f-m) / e temporaries
    est += 6 * ic_pad * tj * f32                     # pg / phi / g / g_scaled
    # 2x headroom, floor 4 MiB, generation-dependent cap.
    return int(min(cap, max(4 << 20, 2 * est)))


def _make_kernel(n_actual, n_pad, tj, ic_pad, mxu_dtype, exp_dtype):
    needs_mask = (n_actual != n_pad)

    def kernel(x_ref, wt_ref, bt_ref, wpg_ref, bpg_ref, ww_ref, bw_ref,
               out_ref, theta_s, y_acc):
        j = pl.program_id(1)
        nj = pl.num_programs(1)

        # Per-batch init: theta over the full spatial extent + y accumulator.
        # The full C x N slab load lives only inside the two pl.when bodies.
        @pl.when(j == 0)
        def _init():
            x_full = x_ref[0]                                    # (C, N_pad)
            theta = (jnp.dot(wt_ref[...], x_full,
                             preferred_element_type=jnp.float32)
                     + bt_ref[...])                              # (IC_pad, N_pad)
            theta_s[...] = theta.astype(theta_s.dtype)           # bf16 MXU operand
            y_acc[...] = jnp.zeros_like(y_acc)

        # j-window of x: lane-aligned slice of the resident slab (no second
        # input stream, no extra HBM traffic).
        col0 = pl.multiple_of(j * tj, 128)
        x_blk = x_ref[0, :, pl.ds(col0, tj)]                     # (C, TJ)

        # Fused phi|g projection (one small matmul, sublane-aligned split).
        pg = (jnp.dot(wpg_ref[...], x_blk, preferred_element_type=jnp.float32)
              + bpg_ref[...])                                    # (2*IC_pad, TJ)
        phi_blk = pg[:ic_pad].astype(mxu_dtype)                  # (IC_pad, TJ)
        g_blk = pg[ic_pad:]                                      # (IC_pad, TJ) f32

        # f[i, jj] = sum_c theta[c, i] * phi[c, jj] (bf16 operands, f32 acc).
        f = lax.dot_general(theta_s[...], phi_blk,
                            dimension_numbers=(((0,), (0,)), ((), ())),
                            preferred_element_type=jnp.float32)  # (N_pad, TJ)

        if needs_mask:
            # Padded spatial rows must not contribute to the softmax sum.
            row_ids = lax.broadcasted_iota(jnp.int32, (n_pad, 1), 0)
            f = jnp.where(row_ids < n_actual, f, -1e30)

        # torch F.softmax(f, dim=1) == softmax over the row index i (axis 0),
        # fully contained inside a column tile.  Max + sum kept in f32; exp in
        # bf16 on bf16-EUP parts (v6e/v7x), f32 otherwise.
        m = jnp.max(f, axis=0, keepdims=True)                    # (1, TJ) f32
        e = jnp.exp((f - m).astype(exp_dtype))                   # (N_pad, TJ)
        s = jnp.sum(e.astype(jnp.float32), axis=0, keepdims=True)  # f32 accumulate
        inv_s = pl.reciprocal(s, approx=True)                    # EUP, (1, TJ)

        # Fold the normalization into g (per-column scale), not into e:
        # replaces an N x TJ multiply with an IC x TJ multiply.
        g_scaled = g_blk * inv_s                                 # (IC_pad, TJ)
        if needs_mask:
            # Padded spatial columns must not contribute to y.
            col_ids = j * tj + lax.broadcasted_iota(jnp.int32, (1, tj), 1)
            g_scaled = jnp.where(col_ids < n_actual, g_scaled, 0.0)

        # y[k, i] += sum_jj g_scaled[k, jj] * e[i, jj]  (bf16 operands, f32 acc).
        y_acc[...] += lax.dot_general(
            g_scaled.astype(mxu_dtype), e.astype(mxu_dtype),
            dimension_numbers=(((1,), (1,)), ((), ())),
            preferred_element_type=jnp.float32)                  # (IC_pad, N_pad)

        # Final 1x1 W conv + bias + residual, lane-dense (C, N) store once per batch.
        @pl.when(j == nj - 1)
        def _finalize():
            x_full = x_ref[0]
            w_y = (jnp.dot(ww_ref[...], y_acc[...],
                           preferred_element_type=jnp.float32)
                   + bw_ref[...])                                # (C, N_pad)
            out_ref[0] = (w_y + x_full).astype(out_ref.dtype)

    return kernel


def nonlocal_block_2d(x_nchw, params, *, tile_j=None):
    """NonLocalBlock2D forward. x_nchw: (B, C, H, W) float32."""
    B, C, H, W = x_nchw.shape
    N = H * W
    IC = params["w_theta"].shape[0]

    gen = _tpu_generation()
    mxu_dtype = jnp.bfloat16                                   # MXU-native everywhere
    exp_dtype = jnp.bfloat16 if (gen is None or gen >= 6) else jnp.float32
    vmem_cap = {7: 56 << 20, 6: 100 << 20, 5: 100 << 20}.get(gen, 64 << 20)
    max_tile = 256 if gen == 7 else 512                        # f/e temps are N_pad x TJ

    # Pad spatial extent to a lane multiple and inter_channels to a sublane
    # multiple; padded rows/cols are masked inside the kernel.
    N_pad = -(-N // 128) * 128
    IC_pad = -(-IC // 8) * 8

    TJ = _pick_tile_j(N_pad, max_tile) if tile_j is None else tile_j
    assert N_pad % TJ == 0 and TJ % 128 == 0, "bad j tile"
    NJ = N_pad // TJ

    # Channels-first: reshape only, no HBM transpose passes.
    x = x_nchw.reshape(B, C, N)
    if N_pad != N:
        x = jnp.pad(x, ((0, 0), (0, 0), (0, N_pad - N)))

    def pad_proj(w, b):
        if IC_pad != IC:
            w = jnp.pad(w, ((0, IC_pad - IC), (0, 0)))
            b = jnp.pad(b, ((0, IC_pad - IC),))
        return w, b

    wt, bt = pad_proj(params["w_theta"], params["b_theta"])
    wphi, bphi = pad_proj(params["w_phi"], params["b_phi"])
    wg, bg = pad_proj(params["w_g"], params["b_g"])
    wpg = jnp.concatenate([wphi, wg], axis=0)                  # (2*IC_pad, C)
    bpg = jnp.concatenate([bphi, bg], axis=0)[:, None]         # (2*IC_pad, 1)
    bt = bt[:, None]                                           # (IC_pad, 1)
    wW = params["w_W"]
    if IC_pad != IC:
        wW = jnp.pad(wW, ((0, 0), (0, IC_pad - IC)))           # (C, IC_pad)
    bW = params["b_W"][:, None]                                # (C, 1)

    kernel = _make_kernel(N, N_pad, TJ, IC_pad, mxu_dtype, exp_dtype)

    grid_spec = pltpu.PrefetchScalarGridSpec(
        num_scalar_prefetch=0,
        grid=(B, NJ),
        in_specs=[
            pl.BlockSpec((1, C, N_pad), lambda b, j: (b, 0, 0)),   # x, full slab
            pl.BlockSpec((IC_pad, C), lambda b, j: (0, 0)),        # w_theta
            pl.BlockSpec((IC_pad, 1), lambda b, j: (0, 0)),        # b_theta
            pl.BlockSpec((2 * IC_pad, C), lambda b, j: (0, 0)),    # w_phi|w_g
            pl.BlockSpec((2 * IC_pad, 1), lambda b, j: (0, 0)),    # b_phi|b_g
            pl.BlockSpec((C, IC_pad), lambda b, j: (0, 0)),        # w_W
            pl.BlockSpec((C, 1), lambda b, j: (0, 0)),             # b_W
        ],
        out_specs=pl.BlockSpec((1, C, N_pad), lambda b, j: (b, 0, 0)),
        scratch_shapes=[
            pltpu.VMEM((IC_pad, N_pad), mxu_dtype),   # theta (resident per batch)
            pltpu.VMEM((IC_pad, N_pad), jnp.float32), # y accumulator
        ],
    )

    out = pl.pallas_call(
        kernel,
        out_shape=jax.ShapeDtypeStruct((B, C, N_pad), x.dtype),
        grid_spec=grid_spec,
        compiler_params=pltpu.CompilerParams(
            dimension_semantics=("parallel", "arbitrary"),
            vmem_limit_bytes=_vmem_limit_bytes(
                C, IC_pad, N_pad, TJ, jnp.dtype(exp_dtype).itemsize, vmem_cap),
        ),
        # NOTE(perf): with the duplicate x stream gone, input_output_aliases
        # {0: 0} is safe at the kernel level (x for batch b is read before the
        # batch-b output block is written back); left disabled because callers
        # here reuse x after the call, which would force a defensive copy.
        # NOTE(perf): on v7x, pipeline_mode=pl.Buffered(1) on the slab/output
        # specs and a 2-way j-split across TensorCores for B==1 (partial-y
        # outputs summed in an epilogue) would be the next wins.
    )(x, wt, bt, wpg, bpg, wW, bW)

    if N_pad != N:
        out = out[:, :, :N]
    return out.reshape(B, C, H, W)


def reference_nonlocal(x, params):
    """Pure-JAX reference matching the PyTorch forward exactly."""
    B, C, H, W = x.shape
    N = H * W

    def conv1x1(inp, w, b):
        return jnp.einsum('bchw,oc->bohw', inp, w) + b[None, :, None, None]

    g_x = conv1x1(x, params["w_g"], params["b_g"]).reshape(B, -1, N).transpose(0, 2, 1)
    theta_x = conv1x1(x, params["w_theta"], params["b_theta"]).reshape(B, -1, N).transpose(0, 2, 1)
    phi_x = conv1x1(x, params["w_phi"], params["b_phi"]).reshape(B, -1, N)
    f = jnp.einsum('bnk,bkm->bnm', theta_x, phi_x)
    f_div_c = jax.nn.softmax(f, axis=1)                      # torch dim=1
    y = jnp.einsum('bnm,bmk->bnk', f_div_c, g_x)
    y = y.transpose(0, 2, 1).reshape(B, -1, H, W)
    W_y = conv1x1(y, params["w_W"], params["b_W"])
    return W_y + x


def make_params(key, in_channels, inter_channels, zero_W=True):
    ks = jax.random.split(key, 8)
    scale = 0.1
    p = {
        "w_g": scale * jax.random.normal(ks[0], (inter_channels, in_channels), jnp.float32),
        "b_g": scale * jax.random.normal(ks[1], (inter_channels,), jnp.float32),
        "w_theta": scale * jax.random.normal(ks[2], (inter_channels, in_channels), jnp.float32),
        "b_theta": scale * jax.random.normal(ks[3], (inter_channels,), jnp.float32),
        "w_phi": scale * jax.random.normal(ks[4], (inter_channels, in_channels), jnp.float32),
        "b_phi": scale * jax.random.normal(ks[5], (inter_channels,), jnp.float32),
    }
    if zero_W:
        # Faithful to nn.init.constant_(self.W.weight, 0) / constant_(bias, 0)
        p["w_W"] = jnp.zeros((in_channels, inter_channels), jnp.float32)
        p["b_W"] = jnp.zeros((in_channels,), jnp.float32)
    else:
        p["w_W"] = scale * jax.random.normal(ks[6], (in_channels, inter_channels), jnp.float32)
        p["b_W"] = scale * jax.random.normal(ks[7], (in_channels,), jnp.float32)
    return p


if __name__ == "__main__":
    key = jax.random.PRNGKey(0)
    kx, kp, kx2 = jax.random.split(key, 3)

    # Tolerance covers the approximate-reciprocal softmax normalization and
    # the bf16 exp / bf16 MXU-operand path (errors measured well below 1e-3).
    ATOL = RTOL = 1e-3

    # 1) Faithful module init (W conv zero-initialized); multi j-tile path,
    #    inter_channels padded 2 -> 8.
    B, C, H, W = 2, 4, 16, 16
    INTER = 2
    x = jax.random.normal(kx, (B, C, H, W), jnp.float32)
    params = make_params(kp, C, INTER, zero_W=True)
    z = nonlocal_block_2d(x, params, tile_j=128)          # N=256 -> 2 j-tiles
    jax.block_until_ready(z)
    assert jnp.allclose(z, reference_nonlocal(x, params), atol=ATOL, rtol=RTOL)

    # 2) Non-zero W so the attention path is exercised end-to-end; single-tile path.
    params_nz = make_params(kp, C, INTER, zero_W=False)
    z2 = nonlocal_block_2d(x, params_nz)                  # default tile -> NJ=1
    jax.block_until_ready(z2)
    assert jnp.allclose(z2, reference_nonlocal(x, params_nz), atol=ATOL, rtol=RTOL)

    # 3) Non-128-divisible spatial extent: N=100 padded to 128 with in-kernel
    #    row/column masking, inter_channels 3 -> 8.
    x3 = jax.random.normal(kx2, (1, 4, 10, 10), jnp.float32)
    params3 = make_params(kp, 4, 3, zero_W=False)
    z3 = nonlocal_block_2d(x3, params3)
    jax.block_until_ready(z3)
    assert jnp.allclose(z3, reference_nonlocal(x3, params3), atol=ATOL, rtol=RTOL)

    print("KERNEL_OK")
</pallas_src>

<mosaic_0001>
module attributes {stable_mosaic.version = 11 : i64} {
  func.func @kernel(%arg0: i32, %arg1: i32, %arg2: memref<1x4x256xf32, #tpu.memory_space<vmem>>, %arg3: memref<8x4xf32, #tpu.memory_space<vmem>>, %arg4: memref<8x1xf32, #tpu.memory_space<vmem>>, %arg5: memref<16x4xf32, #tpu.memory_space<vmem>>, %arg6: memref<16x1xf32, #tpu.memory_space<vmem>>, %arg7: memref<4x8xf32, #tpu.memory_space<vmem>>, %arg8: memref<4x1xf32, #tpu.memory_space<vmem>>, %arg9: memref<1x4x256xf32, #tpu.memory_space<vmem>>, %arg10: memref<8x256xbf16, #tpu.memory_space<vmem>>, %arg11: memref<8x256xf32, #tpu.memory_space<vmem>>) attributes {dimension_semantics = [#tpu.dimension_semantics<parallel>, #tpu.dimension_semantics<arbitrary>], iteration_bounds = array<i64: 2, 2>, scalar_prefetch = 0 : i64, scratch_operands = 2 : i64, tpu.core_type = #tpu.core_type<tc>, window_params = [{transform_indices = @transform_0, window_bounds = array<i64: 1, 4, 256>}, {pipeline_mode = #tpu.pipeline_mode<synchronous>, transform_indices = @transform_1, window_bounds = array<i64: 8, 4>}, {pipeline_mode = #tpu.pipeline_mode<synchronous>, transform_indices = @transform_2, window_bounds = array<i64: 8, 1>}, {pipeline_mode = #tpu.pipeline_mode<synchronous>, transform_indices = @transform_3, window_bounds = array<i64: 16, 4>}, {pipeline_mode = #tpu.pipeline_mode<synchronous>, transform_indices = @transform_4, window_bounds = array<i64: 16, 1>}, {pipeline_mode = #tpu.pipeline_mode<synchronous>, transform_indices = @transform_5, window_bounds = array<i64: 4, 8>}, {pipeline_mode = #tpu.pipeline_mode<synchronous>, transform_indices = @transform_6, window_bounds = array<i64: 4, 1>}, {transform_indices = @transform_7, window_bounds = array<i64: 1, 4, 256>}]} {
    %c0_i32 = arith.constant 0 : i32
    %0 = arith.cmpi eq, %arg1, %c0_i32 : i32
    %1 = arith.extui %0 : i1 to i32
    %c0_i32_0 = arith.constant 0 : i32
    %2 = arith.cmpi ne, %1, %c0_i32_0 : i32
    scf.if %2 {
      %c0_17 = arith.constant 0 : index
      %c0_18 = arith.constant 0 : index
      %c0_19 = arith.constant 0 : index
      %38 = vector.load %arg2[%c0_17, %c0_18, %c0_19] : memref<1x4x256xf32, #tpu.memory_space<vmem>>, vector<1x4x256xf32>
      %39 = vector.shape_cast %38 : vector<1x4x256xf32> to vector<4x256xf32>
      %c0_20 = arith.constant 0 : index
      %c0_21 = arith.constant 0 : index
      %40 = vector.load %arg3[%c0_20, %c0_21] : memref<8x4xf32, #tpu.memory_space<vmem>>, vector<8x4xf32>
      %cst_22 = arith.constant dense<0.000000e+00> : vector<8x256xf32>
      %41 = tpu.matmul %40, %39, %cst_22 {dimension_numbers = #tpu.dot_dimension_numbers<[1], [0], [0], [1], [0, 0, 1, 1], [], []>} : vector<8x4xf32>, vector<4x256xf32>, vector<8x256xf32> -> vector<8x256xf32>
      %c0_23 = arith.constant 0 : index
      %c0_24 = arith.constant 0 : index
      %42 = vector.load %arg4[%c0_23, %c0_24] : memref<8x1xf32, #tpu.memory_space<vmem>>, vector<8x1xf32>
      %43 = vector.broadcast %42 : vector<8x1xf32> to vector<8x256xf32>
      %44 = arith.addf %41, %43 : vector<8x256xf32>
      %45 = arith.truncf %44 : vector<8x256xf32> to vector<8x256xbf16>
      %c0_25 = arith.constant 0 : index
      %c0_26 = arith.constant 0 : index
      %46 = vector.load %arg10[%c0_25, %c0_26] : memref<8x256xbf16, #tpu.memory_space<vmem>>, vector<8x256xbf16>
      tpu.vector_store %arg10[%c0_25, %c0_26], %45 {strides = array<i32>} : memref<8x256xbf16, #tpu.memory_space<vmem>>, vector<8x256xbf16>,
      %cst_27 = arith.constant 0.000000e+00 : f32
      %47 = vector.broadcast %cst_27 : f32 to vector<8x256xf32>
      %c0_28 = arith.constant 0 : index
      %c0_29 = arith.constant 0 : index
      %48 = vector.load %arg11[%c0_28, %c0_29] : memref<8x256xf32, #tpu.memory_space<vmem>>, vector<8x256xf32>
      tpu.vector_store %arg11[%c0_28, %c0_29], %47 {strides = array<i32>} : memref<8x256xf32, #tpu.memory_space<vmem>>, vector<8x256xf32>,
    } else {
    }
    %c128_i32 = arith.constant 128 : i32
    %3 = arith.muli %arg1, %c128_i32 : i32
    %4 = tpu.assume_multiple %3, 128 : i32
    %c0 = arith.constant 0 : index
    %c0_1 = arith.constant 0 : index
    %5 = arith.index_cast %4 : i32 to index
    %6 = vector.load %arg2[%c0, %c0_1, %5] : memref<1x4x256xf32, #tpu.memory_space<vmem>>, vector<1x4x128xf32>
    %7 = vector.shape_cast %6 : vector<1x4x128xf32> to vector<4x128xf32>
    %c0_2 = arith.constant 0 : index
    %c0_3 = arith.constant 0 : index
    %8 = vector.load %arg5[%c0_2, %c0_3] : memref<16x4xf32, #tpu.memory_space<vmem>>, vector<16x4xf32>
    %cst = arith.constant dense<0.000000e+00> : vector<16x128xf32>
    %9 = tpu.matmul %8, %7, %cst {dimension_numbers = #tpu.dot_dimension_numbers<[1], [0], [0], [1], [0, 0, 1, 1], [], []>} : vector<16x4xf32>, vector<4x128xf32>, vector<16x128xf32> -> vector<16x128xf32>
    %c0_4 = arith.constant 0 : index
    %c0_5 = arith.constant 0 : index
    %10 = vector.load %arg6[%c0_4, %c0_5] : memref<16x1xf32, #tpu.memory_space<vmem>>, vector<16x1xf32>
    %11 = vector.broadcast %10 : vector<16x1xf32> to vector<16x128xf32>
    %12 = arith.addf %9, %11 : vector<16x128xf32>
    %13 = vector.extract_strided_slice %12 {offsets = [0, 0], sizes = [8, 128], strides = [1, 1]} : vector<16x128xf32> to vector<8x128xf32>
    %14 = arith.truncf %13 : vector<8x128xf32> to vector<8x128xbf16>
    %15 = vector.extract_strided_slice %12 {offsets = [8, 0], sizes = [8, 128], strides = [1, 1]} : vector<16x128xf32> to vector<8x128xf32>
    %c0_6 = arith.constant 0 : index
    %c0_7 = arith.constant 0 : index
    %16 = vector.load %arg10[%c0_6, %c0_7] : memref<8x256xbf16, #tpu.memory_space<vmem>>, vector<8x256xbf16>
    %cst_8 = arith.constant dense<0.000000e+00> : vector<256x128xf32>
    %17 = tpu.matmul %16, %14, %cst_8 {dimension_numbers = #tpu.dot_dimension_numbers<[0], [0], [1], [1], [0, 1, 1, 1], [], []>} : vector<8x256xbf16>, vector<8x128xbf16>, vector<256x128xf32> -> vector<256x128xf32>
    %cst_9 = arith.constant dense<0xFF800000> : vector<128xf32>
    %18 = vector.multi_reduction <maximumf>, %17, %cst_9 [0] : vector<256x128xf32> to vector<128xf32>
    %19 = vector.shape_cast %18 : vector<128xf32> to vector<1x128xf32>
    %20 = vector.broadcast %19 : vector<1x128xf32> to vector<256x128xf32>
    %21 = arith.subf %17, %20 : vector<256x128xf32>
    %22 = arith.truncf %21 : vector<256x128xf32> to vector<256x128xbf16>
    %23 = math.exp %22 : vector<256x128xbf16>
    %24 = arith.extf %23 : vector<256x128xbf16> to vector<256x128xf32>
    %cst_10 = arith.constant dense<0.000000e+00> : vector<128xf32>
    %25 = vector.multi_reduction <add>, %24, %cst_10 [0] : vector<256x128xf32> to vector<128xf32>
    %26 = vector.shape_cast %25 : vector<128xf32> to vector<1x128xf32>
    %27 = tpu.reciprocal %26 {approx = true} : vector<1x128xf32> -> vector<1x128xf32>
    %28 = vector.broadcast %27 : vector<1x128xf32> to vector<8x128xf32>
    %29 = arith.mulf %15, %28 : vector<8x128xf32>
    %c0_11 = arith.constant 0 : index
    %c0_12 = arith.constant 0 : index
    %30 = vector.load %arg11[%c0_11, %c0_12] : memref<8x256xf32, #tpu.memory_space<vmem>>, vector<8x256xf32>
    %31 = arith.truncf %29 : vector<8x128xf32> to vector<8x128xbf16>
    %cst_13 = arith.constant dense<0.000000e+00> : vector<8x256xf32>
    %32 = tpu.matmul %31, %23, %cst_13 {dimension_numbers = #tpu.dot_dimension_numbers<[1], [1], [0], [0], [0, 0, 1, 0], [], []>} : vector<8x128xbf16>, vector<256x128xbf16>, vector<8x256xf32> -> vector<8x256xf32>
    %33 = arith.addf %30, %32 : vector<8x256xf32>
    %c0_14 = arith.constant 0 : index
    %c0_15 = arith.constant 0 : index
    %34 = vector.load %arg11[%c0_14, %c0_15] : memref<8x256xf32, #tpu.memory_space<vmem>>, vector<8x256xf32>
    tpu.vector_store %arg11[%c0_14, %c0_15], %33 {strides = array<i32>} : memref<8x256xf32, #tpu.memory_space<vmem>>, vector<8x256xf32>,
    %c1_i32 = arith.constant 1 : i32
    %35 = arith.cmpi eq, %arg1, %c1_i32 : i32
    %36 = arith.extui %35 : i1 to i32
    %c0_i32_16 = arith.constant 0 : i32
    %37 = arith.cmpi ne, %36, %c0_i32_16 : i32
    scf.if %37 {
      %c0_17 = arith.constant 0 : index
      %c0_18 = arith.constant 0 : index
      %c0_19 = arith.constant 0 : index
      %38 = vector.load %arg2[%c0_17, %c0_18, %c0_19] : memref<1x4x256xf32, #tpu.memory_space<vmem>>, vector<1x4x256xf32>
      %39 = vector.shape_cast %38 : vector<1x4x256xf32> to vector<4x256xf32>
      %c0_20 = arith.constant 0 : index
      %c0_21 = arith.constant 0 : index
      %40 = vector.load %arg7[%c0_20, %c0_21] : memref<4x8xf32, #tpu.memory_space<vmem>>, vector<4x8xf32>
      %c0_22 = arith.constant 0 : index
      %c0_23 = arith.constant 0 : index
      %41 = vector.load %arg11[%c0_22, %c0_23] : memref<8x256xf32, #tpu.memory_space<vmem>>, vector<8x256xf32>
      %cst_24 = arith.constant dense<0.000000e+00> : vector<4x256xf32>
      %42 = tpu.matmul %40, %41, %cst_24 {dimension_numbers = #tpu.dot_dimension_numbers<[1], [0], [0], [1], [0, 0, 1, 1], [], []>} : vector<4x8xf32>, vector<8x256xf32>, vector<4x256xf32> -> vector<4x256xf32>
      %c0_25 = arith.constant 0 : index
      %c0_26 = arith.constant 0 : index
      %43 = vector.load %arg8[%c0_25, %c0_26] : memref<4x1xf32, #tpu.memory_space<vmem>>, vector<4x1xf32>
      %44 = vector.broadcast %43 : vector<4x1xf32> to vector<4x256xf32>
      %45 = arith.addf %42, %44 : vector<4x256xf32>
      %46 = arith.addf %45, %39 : vector<4x256xf32>
      %c0_27 = arith.constant 0 : index
      %c0_28 = arith.constant 0 : index
      %c0_29 = arith.constant 0 : index
      %47 = vector.load %arg9[%c0_27, %c0_28, %c0_29] : memref<1x4x256xf32, #tpu.memory_space<vmem>>, vector<1x4x256xf32>
      %48 = vector.shape_cast %47 : vector<1x4x256xf32> to vector<4x256xf32>
      %49 = vector.shape_cast %46 : vector<4x256xf32> to vector<1x4x256xf32>
      tpu.vector_store %arg9[%c0_27, %c0_28, %c0_29], %49 {strides = array<i32>} : memref<1x4x256xf32, #tpu.memory_space<vmem>>, vector<1x4x256xf32>,
    } else {
    }
    return
  }
  func.func @transform_0(%arg0: i32, %arg1: i32) -> (i32, i32, i32) {
    %c0_i32 = arith.constant 0 : i32
    %c0_i32_0 = arith.constant 0 : i32
    %c0_i32_1 = arith.constant 0 : i32
    return %arg0, %c0_i32, %c0_i32_0 : i32, i32, i32
  }
  func.func @transform_1(%arg0: i32, %arg1: i32) -> (i32, i32) {
    %c0_i32 = arith.constant 0 : i32
    %c0_i32_0 = arith.constant 0 : i32
    %c0_i32_1 = arith.constant 0 : i32
    return %c0_i32, %c0_i32_0 : i32, i32
  }
  func.func @transform_2(%arg0: i32, %arg1: i32) -> (i32, i32) {
    %c0_i32 = arith.constant 0 : i32
    %c0_i32_0 = arith.constant 0 : i32
    %c0_i32_1 = arith.constant 0 : i32
    return %c0_i32, %c0_i32_0 : i32, i32
  }
  func.func @transform_3(%arg0: i32, %arg1: i32) -> (i32, i32) {
    %c0_i32 = arith.constant 0 : i32
    %c0_i32_0 = arith.constant 0 : i32
    %c0_i32_1 = arith.constant 0 : i32
    return %c0_i32, %c0_i32_0 : i32, i32
  }
  func.func @transform_4(%arg0: i32, %arg1: i32) -> (i32, i32) {
    %c0_i32 = arith.constant 0 : i32
    %c0_i32_0 = arith.constant 0 : i32
    %c0_i32_1 = arith.constant 0 : i32
    return %c0_i32, %c0_i32_0 : i32, i32
  }
  func.func @transform_5(%arg0: i32, %arg1: i32) -> (i32, i32) {
    %c0_i32 = arith.constant 0 : i32
    %c0_i32_0 = arith.constant 0 : i32
    %c0_i32_1 = arith.constant 0 : i32
    return %c0_i32, %c0_i32_0 : i32, i32
  }
  func.func @transform_6(%arg0: i32, %arg1: i32) -> (i32, i32) {
    %c0_i32 = arith.constant 0 : i32
    %c0_i32_0 = arith.constant 0 : i32
    %c0_i32_1 = arith.constant 0 : i32
    return %c0_i32, %c0_i32_0 : i32, i32
  }
  func.func @transform_7(%arg0: i32, %arg1: i32) -> (i32, i32, i32) {
    %c0_i32 = arith.constant 0 : i32
    %c0_i32_0 = arith.constant 0 : i32
    %c0_i32_1 = arith.constant 0 : i32
    return %arg0, %c0_i32, %c0_i32_0 : i32, i32, i32
  }
}

</mosaic_0001>

<llo_original>
// kernel: tpu_custom_call.1
$region0: #{tpu_custom_call.1}
  #allocation0 [shape = 'u32[]', space=smem, size = 0x4, offset = 0x4, fixed_abs, tag = 'smem constant byte address 0x4 - core index']
  #allocation1 [shape = 'u32[144,128]{1,0:T(1,128)}', space=vmem, size = 0x12000, scoped, tag = 'internal scratch']
  #allocation2 [shape = 'bf16[8,256]{1,0:T(8,128)(2,1)}', space=vmem, size = 0x1000, scoped, tag = 'scratch operand']
  #allocation3 [shape = 'f32[8,256]{1,0:T(8,128)}', space=vmem, size = 0x2000, scoped, tag = 'scratch operand']
  %s0 = inlined_call_operand.vmem [shape: f32[2,4,256], index: 0, kind: input, shape index: {}]
  %s1 = inlined_call_operand.vmem [shape: f32[8,4], index: 1, kind: input, shape index: {}]
  %s2 = inlined_call_operand.vmem [shape: f32[8,1], index: 2, kind: input, shape index: {}]
  %s3 = inlined_call_operand.vmem [shape: f32[16,4], index: 3, kind: input, shape index: {}]
  %s4 = inlined_call_operand.vmem [shape: f32[16,1], index: 4, kind: input, shape index: {}]
  %s5 = inlined_call_operand.vmem [shape: f32[4,8], index: 5, kind: input, shape index: {}]
  %s6 = inlined_call_operand.vmem [shape: f32[4,1], index: 6, kind: input, shape index: {}]
  %s7 = inlined_call_operand.hbm [shape: f32[2,4,256], index: 7, kind: output, shape index: {}]
  %s8 = sld [smem:[#allocation0]]
  $region69: #{tpu_custom_call.1} parent=0
    _
  %s10 = ssub.s32 1, %s8
  %s11 = scalar_select 0, %s10, %s8
  $region1: #{tpu_custom_call.1} parent=0
    #allocation4 [shape = 'u8[8192]{0}', space=vmem, size = 0x2000, scoped, tag = 'output window, operand 0']
    #allocation5 [shape = 's32[2]{0}', space=sflag, size = 0x8, scoped, tag = 'scoped memory for tpu_custom_call.1']
    %12 = vsyncpa [#allocation5], 0
    %s13 = scalar_lea.sflag [#allocation5], 1
    %14 = vsyncpa %s13, 0
    loop: start=0, step=1, limit=6
    $region2: #{tpu_custom_call.1} parent=1 // loop_pre_header
      _
    $region3: #{tpu_custom_call.1} parent=1 // loop_header
      %s16 = sphi 0, %s20
      %p17 = scmp.ge.s32.totalorder %s16, 6
      %s23 = sphi 0, %s35
      %s24 = sphi 0, %s31
      %s25 = sphi 0, %s23
      %s26 = sphi 0, %s24
      %s27 = sphi 0, %s25
      %s28 = sphi 0, %s26
      %s38 = sphi 0, %s40
      %s41 = sphi 0, %s38
      %s42 = sphi 0, %s41
      %s58 = sphi 0, %s42
      %s62 = sphi 0, %s62
      %s64 = sphi 0, %s62
      %s65 = sphi 0, %s64
      %s79 = sphi 0, %s65
      %s83 = sphi 0, %s83
      %s85 = sphi 0, %s83
      %s86 = sphi 0, %s85
      %s100 = sphi 0, %s86
      %s104 = sphi 0, %s104
      %s106 = sphi 0, %s104
      %s107 = sphi 0, %s106
      %s121 = sphi 0, %s107
      %s125 = sphi 0, %s125
      %s127 = sphi 0, %s125
      %s128 = sphi 0, %s127
      %s142 = sphi 0, %s128
      %s146 = sphi 0, %s146
      %s148 = sphi 0, %s146
      %s149 = sphi 0, %s148
      %s163 = sphi 0, %s149
      %s167 = sphi 0, %s167
      %s169 = sphi 0, %s167
      %s170 = sphi 0, %s169
      %s184 = sphi 0, %s170
      %s190 = sphi 0, %s192
      %s193 = sphi 0, %s190
      %s194 = sphi 0, %s193
      %s210 = sphi 0, %s194
    $region4: #{tpu_custom_call.1} parent=1 // loop_header_branch
      %19 = sbr.rel (%p17) target = $region8
    $region5: #{tpu_custom_call.1} parent=1 // loop_body
      %s21 = ssub.s32 %s16, 1
      %s22 = ssub.s32 %s16, 2
      %s29 = sadd.s32 1, %s24
      %p30 = scmp.ge.s32.totalorder %s29, 2
      %s31 = scalar_select %p30, 0, %s29
      %s32 = sadd.s32 1, %s23
      %s33 = scalar_select %p30, %s32, %s23
      %p34 = scmp.ge.s32.totalorder %s33, 2
      %s35 = scalar_select %p34, 0, %s33
      %s36 = ssub.s32 %s23, %s35
      %p37 = scmp.eq.s32.totalorder %s36, 0
      %s39 = sadd.s32 %s38, 1
      %s40 = scalar_select %p37, %s38, %s39
      %p43 = pneg %p37
      %p44 = scmp.eq.s32.totalorder %s16, 3
      %p45 = por %p43, %p44
      %p46 = scmp.ne.s32.totalorder %s38, %s41
      %p47 = scmp.eq.s32.totalorder %s16, 0
      %p48 = por %p46, %p47
      %p49 = scmp.ne.s32.totalorder %s38, %s41
      %p50 = scmp.eq.s32.totalorder %s21, 3
      %p51 = por %p49, %p50
      %p52 = scmp.ne.s32.totalorder %s41, %s42
      %p53 = scmp.eq.s32.totalorder %s21, 0
      %p54 = por %p52, %p53
      %p55 = scmp.ne.s32.totalorder %s41, %s42
      %p56 = scmp.eq.s32.totalorder %s22, 3
      %p57 = por %p55, %p56
      %p59 = scmp.ne.s32.totalorder %s42, %s58
      %p60 = scmp.eq.s32.totalorder %s22, 0
      %p61 = por %p59, %p60
      %s63 = sadd.s32 %s62, 1
      %p66 = scmp.eq.s32.totalorder %s16, 3
      %p67 = scmp.ne.s32.totalorder %s62, %s64
      %p68 = scmp.eq.s32.totalorder %s16, 0
      %p69 = por %p67, %p68
      %p70 = scmp.ne.s32.totalorder %s62, %s64
      %p71 = scmp.eq.s32.totalorder %s21, 3
      %p72 = por %p70, %p71
      %p73 = scmp.ne.s32.totalorder %s64, %s65
      %p74 = scmp.eq.s32.totalorder %s21, 0
      %p75 = por %p73, %p74
      %p76 = scmp.ne.s32.totalorder %s64, %s65
      %p77 = scmp.eq.s32.totalorder %s22, 3
      %p78 = por %p76, %p77
      %p80 = scmp.ne.s32.totalorder %s65, %s79
      %p81 = scmp.eq.s32.totalorder %s22, 0
      %p82 = por %p80, %p81
      %s84 = sadd.s32 %s83, 1
      %p87 = scmp.eq.s32.totalorder %s16, 3
      %p88 = scmp.ne.s32.totalorder %s83, %s85
      %p89 = scmp.eq.s32.totalorder %s16, 0
      %p90 = por %p88, %p89
      %p91 = scmp.ne.s32.totalorder %s83, %s85
      %p92 = scmp.eq.s32.totalorder %s21, 3
      %p93 = por %p91, %p92
      %p94 = scmp.ne.s32.totalorder %s85, %s86
      %p95 = scmp.eq.s32.totalorder %s21, 0
      %p96 = por %p94, %p95
      %p97 = scmp.ne.s32.totalorder %s85, %s86
      %p98 = scmp.eq.s32.totalorder %s22, 3
      %p99 = por %p97, %p98
      %p101 = scmp.ne.s32.totalorder %s86, %s100
      %p102 = scmp.eq.s32.totalorder %s22, 0
      %p103 = por %p101, %p102
      %s105 = sadd.s32 %s104, 1
      %p108 = scmp.eq.s32.totalorder %s16, 3
      %p109 = scmp.ne.s32.totalorder %s104, %s106
      %p110 = scmp.eq.s32.totalorder %s16, 0
      %p111 = por %p109, %p110
      %p112 = scmp.ne.s32.totalorder %s104, %s106
      %p113 = scmp.eq.s32.totalorder %s21, 3
      %p114 = por %p112, %p113
      %p115 = scmp.ne.s32.totalorder %s106, %s107
      %p116 = scmp.eq.s32.totalorder %s21, 0
      %p117 = por %p115, %p116
      %p118 = scmp.ne.s32.totalorder %s106, %s107
      %p119 = scmp.eq.s32.totalorder %s22, 3
      %p120 = por %p118, %p119
      %p122 = scmp.ne.s32.totalorder %s107, %s121
      %p123 = scmp.eq.s32.totalorder %s22, 0
      %p124 = por %p122, %p123
      %s126 = sadd.s32 %s125, 1
      %p129 = scmp.eq.s32.totalorder %s16, 3
      %p130 = scmp.ne.s32.totalorder %s125, %s127
      %p131 = scmp.eq.s32.totalorder %s16, 0
      %p132 = por %p130, %p131
      %p133 = scmp.ne.s32.totalorder %s125, %s127
      %p134 = scmp.eq.s32.totalorder %s21, 3
      %p135 = por %p133, %p134
      %p136 = scmp.ne.s32.totalorder %s127, %s128
      %p137 = scmp.eq.s32.totalorder %s21, 0
      %p138 = por %p136, %p137
      %p139 = scmp.ne.s32.totalorder %s127, %s128
      %p140 = scmp.eq.s32.totalorder %s22, 3
      %p141 = por %p139, %p140
      %p143 = scmp.ne.s32.totalorder %s128, %s142
      %p144 = scmp.eq.s32.totalorder %s22, 0
      %p145 = por %p143, %p144
      %s147 = sadd.s32 %s146, 1
      %p150 = scmp.eq.s32.totalorder %s16, 3
      %p151 = scmp.ne.s32.totalorder %s146, %s148
      %p152 = scmp.eq.s32.totalorder %s16, 0
      %p153 = por %p151, %p152
      %p154 = scmp.ne.s32.totalorder %s146, %s148
      %p155 = scmp.eq.s32.totalorder %s21, 3
      %p156 = por %p154, %p155
      %p157 = scmp.ne.s32.totalorder %s148, %s149
      %p158 = scmp.eq.s32.totalorder %s21, 0
      %p159 = por %p157, %p158
      %p160 = scmp.ne.s32.totalorder %s148, %s149
      %p161 = scmp.eq.s32.totalorder %s22, 3
      %p162 = por %p160, %p161
      %p164 = scmp.ne.s32.totalorder %s149, %s163
      %p165 = scmp.eq.s32.totalorder %s22, 0
      %p166 = por %p164, %p165
      %s168 = sadd.s32 %s167, 1
      %p171 = scmp.eq.s32.totalorder %s16, 3
      %p172 = scmp.ne.s32.totalorder %s167, %s169
      %p173 = scmp.eq.s32.totalorder %s16, 0
      %p174 = por %p172, %p173
      %p175 = scmp.ne.s32.totalorder %s167, %s169
      %p176 = scmp.eq.s32.totalorder %s21, 3
      %p177 = por %p175, %p176
      %p178 = scmp.ne.s32.totalorder %s169, %s170
      %p179 = scmp.eq.s32.totalorder %s21, 0
      %p180 = por %p178, %p179
      %p181 = scmp.ne.s32.totalorder %s169, %s170
      %p182 = scmp.eq.s32.totalorder %s22, 3
      %p183 = por %p181, %p182
      %p185 = scmp.ne.s32.totalorder %s170, %s184
      %p186 = scmp.eq.s32.totalorder %s22, 0
      %p187 = por %p185, %p186
      %s188 = ssub.s32 %s23, %s35
      %p189 = scmp.eq.s32.totalorder %s188, 0
      %s191 = sadd.s32 %s190, 1
      %s192 = scalar_select %p189, %s190, %s191
      %p195 = pneg %p189
      %p196 = scmp.eq.s32.totalorder %s16, 3
      %p197 = por %p195, %p196
      %p198 = scmp.ne.s32.totalorder %s190, %s193
      %p199 = scmp.eq.s32.totalorder %s16, 0
      %p200 = por %p198, %p199
      %p201 = scmp.ne.s32.totalorder %s190, %s193
      %p202 = scmp.eq.s32.totalorder %s21, 3
      %p203 = por %p201, %p202
      %p204 = scmp.ne.s32.totalorder %s193, %s194
      %p205 = scmp.eq.s32.totalorder %s21, 0
      %p206 = por %p204, %p205
      %p207 = scmp.ne.s32.totalorder %s193, %s194
      %p208 = scmp.eq.s32.totalorder %s22, 3
      %p209 = por %p207, %p208
      %p211 = scmp.ne.s32.totalorder %s194, %s210
      %p212 = scmp.eq.s32.totalorder %s22, 0
      %p213 = por %p211, %p212
      %p214 = scmp.le.s32.totalorder 1, %s16
      %p215 = scmp.lt.s32.totalorder %s16, 5
      %p216 = pnand %p214, %p215
      %p217 = pneg %p216
      // Predicated region
      $region9: #{tpu_custom_call.1} parent=5 // pred_check
        _
      $region10: #{tpu_custom_call.1} parent=5 // pred_check_branch
        %219 = sbr.rel (%p216) target = $region12
      $region11: #{tpu_custom_call.1} parent=5 // pred_region
        %s220 = ssub.s32 %s16, 1
        // Predicated region
        $region13: #{tpu_custom_call.1} parent=11 // pred_check
          %p221 = pneg %p75
        $region14: #{tpu_custom_call.1} parent=11 // pred_check_branch
          %223 = sbr.rel (%p221) target = $region16
        $region15: #{tpu_custom_call.1} parent=11 // pred_region
          _
        $region16: #{tpu_custom_call.1} parent=11 // pred_fallthru
          _
        // Predicated region
        $region17: #{tpu_custom_call.1} parent=11 // pred_check
          %p224 = pneg %p96
        $region18: #{tpu_custom_call.1} parent=11 // pred_check_branch
          %226 = sbr.rel (%p224) target = $region20
        $region19: #{tpu_custom_call.1} parent=11 // pred_region
          _
        $region20: #{tpu_custom_call.1} parent=11 // pred_fallthru
          _
        // Predicated region
        $region21: #{tpu_custom_call.1} parent=11 // pred_check
          %p227 = pneg %p117
        $region22: #{tpu_custom_call.1} parent=11 // pred_check_branch
          %229 = sbr.rel (%p227) target = $region24
        $region23: #{tpu_custom_call.1} parent=11 // pred_region
          _
        $region24: #{tpu_custom_call.1} parent=11 // pred_fallthru
          _
        // Predicated region
        $region25: #{tpu_custom_call.1} parent=11 // pred_check
          %p230 = pneg %p138
        $region26: #{tpu_custom_call.1} parent=11 // pred_check_branch
          %232 = sbr.rel (%p230) target = $region28
        $region27: #{tpu_custom_call.1} parent=11 // pred_region
          _
        $region28: #{tpu_custom_call.1} parent=11 // pred_fallthru
          _
        // Predicated region
        $region29: #{tpu_custom_call.1} parent=11 // pred_check
          %p233 = pneg %p159
        $region30: #{tpu_custom_call.1} parent=11 // pred_check_branch
          %235 = sbr.rel (%p233) target = $region32
        $region31: #{tpu_custom_call.1} parent=11 // pred_region
          _
        $region32: #{tpu_custom_call.1} parent=11 // pred_fallthru
          _
        // Predicated region
        $region33: #{tpu_custom_call.1} parent=11 // pred_check
          %p236 = pneg %p180
        $region34: #{tpu_custom_call.1} parent=11 // pred_check_branch
          %238 = sbr.rel (%p236) target = $region36
        $region35: #{tpu_custom_call.1} parent=11 // pred_region
          _
        $region36: #{tpu_custom_call.1} parent=11 // pred_fallthru
          _
      $region12: #{tpu_custom_call.1} parent=5 // pred_fallthru
        _
      %p239 = scmp.lt.s32.totalorder %s16, 4
      // Predicated region
      $region37: #{tpu_custom_call.1} parent=5 // pred_check
        %p240 = pneg %p239
      $region38: #{tpu_custom_call.1} parent=5 // pred_check_branch
        %242 = sbr.rel (%p240) target = $region40
      $region39: #{tpu_custom_call.1} parent=5 // pred_region
        // Predicated region
        $region41: #{tpu_custom_call.1} parent=39 // pred_check
          %p243 = pneg %p48
        $region42: #{tpu_custom_call.1} parent=39 // pred_check_branch
          %245 = sbr.rel (%p243) target = $region44
        $region43: #{tpu_custom_call.1} parent=39 // pred_region
          %p246 = scmp.lt.s32.totalorder %s23, 1
          %s247 = scalar_select %p246, %s23, 1
          %s248 = smul.addr %s247, 2
          %s249 = smul.addr %s248, 4
          %s250 = scalar_lea.vmem %s0, %s249
        $region44: #{tpu_custom_call.1} parent=39 // pred_fallthru
          _
      $region40: #{tpu_custom_call.1} parent=5 // pred_fallthru
        _
      %p251 = scmp.le.s32.totalorder 1, %s16
      %p252 = scmp.lt.s32.totalorder %s16, 5
      %p253 = pnand %p251, %p252
      %p254 = pneg %p253
      // Predicated region
      $region45: #{tpu_custom_call.1} parent=5 // pred_check
        _
      $region46: #{tpu_custom_call.1} parent=5 // pred_check_branch
        %256 = sbr.rel (%p253) target = $region48
      $region47: #{tpu_custom_call.1} parent=5 // pred_region
        %s257 = ssub.s32 %s16, 1
        %p258 = scmp.lt.s32.totalorder %s25, 1
        %s259 = scalar_select %p258, %s25, 1
        %s260 = smul.addr %s259, 2
        %s261 = smul.addr %s260, 4
        %s262 = scalar_lea.vmem %s0, %s261
        %p263 = pneg %p54
        %p264 = pneg %p51
        %p265 = pneg %p75
        %p266 = pneg %p72
        %p267 = pneg %p96
        %p268 = pneg %p93
        %p269 = pneg %p117
        %p270 = pneg %p114
        %p271 = pneg %p138
        %p272 = pneg %p135
        %p273 = pneg %p159
        %p274 = pneg %p156
        %p275 = pneg %p180
        %p276 = pneg %p177
        %p277 = pneg %p206
        %p278 = pneg %p203
        %s279 = sand.u32 %s193, 1
        %s280 = scalar_lea.sflag [#allocation5], %s279
        %s281 = sand.u32 %s193, 1
        %s282 = smul.addr %s281, 8
        %s283 = scalar_lea.vmem [#allocation4], %s282
        %p284 = scmp.lt.s32.totalorder %s25, 1
        %s285 = scalar_select %p284, %s25, 1
        %s286 = smul.addr %s285, 2
        %s287 = smul.addr %s286, 4
        %s288 = scalar_lea.vmem %s0, %s287
        %p290 = scmp.eq.s32.totalorder %s26, 0
        // Predicated region
        $region49: #{tpu_custom_call.1} parent=47 // pred_check
          %p291 = pneg %p290
        $region50: #{tpu_custom_call.1} parent=47 // pred_check_branch
          %293 = sbr.rel (%p291) target = $region52
        $region51: #{tpu_custom_call.1} parent=47 // pred_region
          %v294 = vld [vmem:[%s288] sm:$0xff]
          %v295 = vld [vmem:[%s1] sm:$0xff]
          %v296 = vld [vmem:[%s2] sm:$0xff]
          %298 = vset.pattern.permute.xlu0 0
          %299 = vperm.xlu0 %298, %v296
          %v300 = vpop.permute.xlu0 %299
          %v303 = vcombine.high %v294, %v294
          %vm304 = vcmask 31744
          %v306 = vsel %vm304, %v295, 0
          %vm308 = vcmask 1043456
          %v309 = vsel %vm308, %v294, 0
          %v311 = vsel %vm308, %v303, 0
          %313 = vmatprep.subr.mxu0 0.0
          %314 = vmatpush1.msra.mxu0 0.0
          %315 = vmatprep.subr.mxu0 0.0
          %316 = vmatpush1.msra.mxu0 0.0
          %317 = vmatprep.subr.mxu0 0.0
          %318 = vmatpush1.msra.mxu0 0.0
          %319 = vmatprep.subr.mxu0 0.0
          %320 = vmatpush1.msra.mxu0 0.0
          %321 = vmatprep.subr.mxu0 0.0
          %322 = vmatpush1.msra.mxu0 0.0
          %323 = vmatprep.subr.mxu0 0.0
          %324 = vmatpush1.msra.mxu0 0.0
          %325 = vmatprep.subr.mxu0 0.0
          %326 = vmatpush1.msra.mxu0 0.0
          %327 = vmatprep.subr.mxu0 0.0
          %328 = vmatpush1.msra.mxu0 0.0
          %329 = vmatprep.subr.mxu0 0.0
          %330 = vmatpush1.msra.mxu0 0.0
          %331 = vmatprep.subr.mxu0 0.0
          %332 = vmatpush1.msra.mxu0 0.0
          %333 = vmatprep.subr.mxu0 0.0
          %334 = vmatpush1.msra.mxu0 0.0
          %335 = vmatprep.subr.mxu0 0.0
          %336 = vmatpush1.msra.mxu0 0.0
          %337 = vmatprep.subr.mxu0 0.0
          %338 = vmatpush1.msra.mxu0 0.0
          %339 = vmatprep.subr.mxu0 0.0
          %340 = vmatpush1.msra.mxu0 0.0
          %341 = vmatprep.subr.mxu0 0.0
          %342 = vmatpush1.msra.mxu0 0.0
          %343 = vmatprep.subr.mxu0 %v311
          %344 = vmatpush1.msra.mxu0 %v309
          %345 = vmatprep.subr.mxu0 0.0
          %346 = vmatpush2.msra.mxu0 0.0
          %347 = vmatprep.subr.mxu0 0.0
          %348 = vmatpush2.msra.mxu0 0.0
          %349 = vmatprep.subr.mxu0 0.0
          %350 = vmatpush2.msra.mxu0 0.0
          %351 = vmatprep.subr.mxu0 0.0
          %352 = vmatpush2.msra.mxu0 0.0
          %353 = vmatprep.subr.mxu0 0.0
          %354 = vmatpush2.msra.mxu0 0.0
          %355 = vmatprep.subr.mxu0 0.0
          %356 = vmatpush2.msra.mxu0 0.0
          %357 = vmatprep.subr.mxu0 0.0
          %358 = vmatpush2.msra.mxu0 0.0
          %359 = vmatprep.subr.mxu0 0.0
          %360 = vmatpush2.msra.mxu0 0.0
          %361 = vmatprep.subr.mxu0 0.0
          %362 = vmatpush2.msra.mxu0 0.0
          %363 = vmatprep.subr.mxu0 0.0
          %364 = vmatpush2.msra.mxu0 0.0
          %365 = vmatprep.subr.mxu0 0.0
          %366 = vmatpush2.msra.mxu0 0.0
          %367 = vmatprep.subr.mxu0 0.0
          %368 = vmatpush2.msra.mxu0 0.0
          %369 = vmatprep.subr.mxu0 0.0
          %370 = vmatpush2.msra.mxu0 0.0
          %371 = vmatprep.subr.mxu0 0.0
          %372 = vmatpush2.msra.mxu0 0.0
          %373 = vmatprep.subr.mxu0 0.0
          %374 = vmatpush2.msra.mxu0 0.0
          %375 = vmatprep.subr.mxu0 0.0
          %376 = vmatpush2.msra.mxu0 0.0
          %377 = vmatprep.mubr.f32.mxu0 0.0
          %378 = vmatmul.mubr.f32.gmra.mxu0 %v306
          %v379 = vpop.f32.mrf.mxu0
          %v380 = vadd.f32 %v300, %v379
          %v381 = vpop.f32.mrf.mxu0
          %v382 = vadd.f32 %v300, %v381
          %383 = vdwg.mxu0
          %v384 = vpack.c.bf16 %v380, %v380
          %v385 = vpack.c.bf16 %v382, %v382
          %v388 = vunpack.c.l.b16 %v384
          %v389 = vunpack.c.l.b16 %v385
          %v390 = vpack.c.b16 %v389, %v388
          %392 = vst [vmem:[#allocation2] sm:$0xff] %v390
          %393 = vst [vmem:[#allocation3] sm:$0xff] 0.0
          %394 = vst [vmem:[#allocation3 + $0x8] sm:$0xff] 0.0
        $region52: #{tpu_custom_call.1} parent=47 // pred_fallthru
          _
        %s395 = smul.u32 %s26, 128
        %s396 = sshra.s32 %s395, 7
        %s397 = sand.u32 %s395, 127
        %s398 = smul.addr %s396, 4
        %s399 = scalar_lea.vmem %s288, %s398
        %v400 = vld [vmem:[%s399] sm:$0xf]
        %v401 = vld [vmem:[%s3] sm:$0xff]
        %v402 = vld [vmem:[%s3 + $0x8] sm:$0xff]
        %v403 = vld [vmem:[%s4] sm:$0xff]
        %v404 = vld [vmem:[%s4 + $0x8] sm:$0xff]
        %406 = vset.pattern.permute.xlu0 0
        %407 = vperm.xlu0 %406, %v403
        %v408 = vpop.permute.xlu0 %407
        %411 = vset.pattern.permute.xlu0 0
        %412 = vperm.xlu0 %411, %v404
        %v413 = vpop.permute.xlu0 %412
        %vm415 = vcmask 31744
        %v417 = vsel %vm415, %v401, 0
        %v420 = vsel %vm415, %v402, 0
        %vm422 = vcmask 1043456
        %v424 = vsel %vm422, %v400, 0
        %426 = vmatprep.subr.mxu0 0.0
        %427 = vmatpush1.msra.mxu0 0.0
        %428 = vmatprep.subr.mxu0 0.0
        %429 = vmatpush1.msra.mxu0 0.0
        %430 = vmatprep.subr.mxu0 0.0
        %431 = vmatpush1.msra.mxu0 0.0
        %432 = vmatprep.subr.mxu0 0.0
        %433 = vmatpush1.msra.mxu0 0.0
        %434 = vmatprep.subr.mxu0 0.0
        %435 = vmatpush1.msra.mxu0 0.0
        %436 = vmatprep.subr.mxu0 0.0
        %437 = vmatpush1.msra.mxu0 0.0
        %438 = vmatprep.subr.mxu0 0.0
        %439 = vmatpush1.msra.mxu0 0.0
        %440 = vmatprep.subr.mxu0 0.0
        %441 = vmatpush1.msra.mxu0 0.0
        %442 = vmatprep.subr.mxu0 0.0
        %443 = vmatpush1.msra.mxu0 0.0
        %444 = vmatprep.subr.mxu0 0.0
        %445 = vmatpush1.msra.mxu0 0.0
        %446 = vmatprep.subr.mxu0 0.0
        %447 = vmatpush1.msra.mxu0 0.0
        %448 = vmatprep.subr.mxu0 0.0
        %449 = vmatpush1.msra.mxu0 0.0
        %450 = vmatprep.subr.mxu0 0.0
        %451 = vmatpush1.msra.mxu0 0.0
        %452 = vmatprep.subr.mxu0 0.0
        %453 = vmatpush1.msra.mxu0 0.0
        %454 = vmatprep.subr.mxu0 0.0
        %455 = vmatpush1.msra.mxu0 0.0
        %456 = vmatprep.subr.mxu0 0.0
        %457 = vmatpush1.msra.mxu0 %v424
        %458 = vmatprep.subr.mxu0 0.0
        %459 = vmatpush2.msra.mxu0 0.0
        %460 = vmatprep.subr.mxu0 0.0
        %461 = vmatpush2.msra.mxu0 0.0
        %462 = vmatprep.subr.mxu0 0.0
        %463 = vmatpush2.msra.mxu0 0.0
        %464 = vmatprep.subr.mxu0 0.0
        %465 = vmatpush2.msra.mxu0 0.0
        %466 = vmatprep.subr.mxu0 0.0
        %467 = vmatpush2.msra.mxu0 0.0
        %468 = vmatprep.subr.mxu0 0.0
        %469 = vmatpush2.msra.mxu0 0.0
        %470 = vmatprep.subr.mxu0 0.0
        %471 = vmatpush2.msra.mxu0 0.0
        %472 = vmatprep.subr.mxu0 0.0
        %473 = vmatpush2.msra.mxu0 0.0
        %474 = vmatprep.subr.mxu0 0.0
        %475 = vmatpush2.msra.mxu0 0.0
        %476 = vmatprep.subr.mxu0 0.0
        %477 = vmatpush2.msra.mxu0 0.0
        %478 = vmatprep.subr.mxu0 0.0
        %479 = vmatpush2.msra.mxu0 0.0
        %480 = vmatprep.subr.mxu0 0.0
        %481 = vmatpush2.msra.mxu0 0.0
        %482 = vmatprep.subr.mxu0 0.0
        %483 = vmatpush2.msra.mxu0 0.0
        %484 = vmatprep.subr.mxu0 0.0
        %485 = vmatpush2.msra.mxu0 0.0
        %486 = vmatprep.subr.mxu0 0.0
        %487 = vmatpush2.msra.mxu0 0.0
        %488 = vmatprep.subr.mxu0 0.0
        %489 = vmatpush2.msra.mxu0 0.0
        %490 = vmatprep.mubr.f32.mxu0 0.0
        %491 = vmatmul.mubr.f32.gmra.mxu0 %v417
        %v492 = vpop.f32.mrf.mxu0
        %v493 = vadd.f32 %v408, %v492
        %v494 = vpop.f32.mrf.mxu0
        %495 = vmatprep.mubr.f32.mxu0 0.0
        %496 = vmatmul.mubr.f32.gmra.mxu0 %v420
        %v497 = vpop.f32.mrf.mxu0
        %v498 = vadd.f32 %v413, %v497
        %v499 = vpop.f32.mrf.mxu0
        %500 = vdwg.mxu0
        %v501 = vpack.c.bf16 %v493, %v493
        %v502 = vld [vmem:[#allocation2] sm:$0xff]
        %v504 = vunpack.c.l.b16 %v502
        %v505 = vunpack.c.h.b16 %v502
        %v506 = vpack.c.b16 %v504, %v504
        %v507 = vpack.c.b16 %v505, %v505
        %510 = vxpose.xlu0.c.b16.start [1/8] %v506, 128
        %511 = vxpose.xlu0.c.b16.cont [2/8] 0, 128
        %512 = vxpose.xlu0.c.b16.cont [3/8] 0, 128
        %513 = vxpose.xlu0.c.b16.cont [4/8] 0, 128
        %514 = vxpose.xlu0.c.b16.cont [5/8] 0, 128
        %515 = vxpose.xlu0.c.b16.cont [6/8] 0, 128
        %516 = vxpose.xlu0.c.b16.cont [7/8] 0, 128
        %517 = vxpose.xlu0.c.b16.end [8/8] 0, 128
        %v518 = vpop.trf.xlu0
        %v519 = vpop.trf.xlu0
        %v520 = vpop.trf.xlu0
        %v521 = vpop.trf.xlu0
        %v522 = vpop.trf.xlu0
        %v523 = vpop.trf.xlu0
        %v524 = vpop.trf.xlu0
        %v525 = vpop.trf.xlu0
        %526 = vxpose.xlu0.c.b16.start [1/8] %v507, 128
        %527 = vxpose.xlu0.c.b16.cont [2/8] 0, 128
        %528 = vxpose.xlu0.c.b16.cont [3/8] 0, 128
        %529 = vxpose.xlu0.c.b16.cont [4/8] 0, 128
        %530 = vxpose.xlu0.c.b16.cont [5/8] 0, 128
        %531 = vxpose.xlu0.c.b16.cont [6/8] 0, 128
        %532 = vxpose.xlu0.c.b16.cont [7/8] 0, 128
        %533 = vxpose.xlu0.c.b16.end [8/8] 0, 128
        %v534 = vpop.trf.xlu0
        %v535 = vpop.trf.xlu0
        %v536 = vpop.trf.xlu0
        %v537 = vpop.trf.xlu0
        %v538 = vpop.trf.xlu0
        %v539 = vpop.trf.xlu0
        %v540 = vpop.trf.xlu0
        %v541 = vpop.trf.xlu0
        %vm542 = vcmask 64512
        %v544 = vsel %vm542, %v518, 0
        %v547 = vsel %vm542, %v519, 0
        %v550 = vsel %vm542, %v520, 0
        %v553 = vsel %vm542, %v521, 0
        %v556 = vsel %vm542, %v522, 0
        %v559 = vsel %vm542, %v523, 0
        %v562 = vsel %vm542, %v524, 0
        %v565 = vsel %vm542, %v525, 0
        %v568 = vsel %vm542, %v534, 0
        %v571 = vsel %vm542, %v535, 0
        %v574 = vsel %vm542, %v536, 0
        %v577 = vsel %vm542, %v537, 0
        %v580 = vsel %vm542, %v538, 0
        %v583 = vsel %vm542, %v539, 0
        %v586 = vsel %vm542, %v540, 0
        %v589 = vsel %vm542, %v541, 0
        %v592 = vsel %vm422, %v501, 0
        %594 = vmatprep.subr.bf16.mxu0 0
        %595 = vmatpush1.bf16.msra.mxu0 0
        %596 = vmatprep.subr.bf16.mxu0 0
        %597 = vmatpush1.bf16.msra.mxu0 0
        %598 = vmatprep.subr.bf16.mxu0 0
        %599 = vmatpush1.bf16.msra.mxu0 0
        %600 = vmatprep.subr.bf16.mxu0 0
        %601 = vmatpush1.bf16.msra.mxu0 0
        %602 = vmatprep.subr.bf16.mxu0 0
        %603 = vmatpush1.bf16.msra.mxu0 0
        %604 = vmatprep.subr.bf16.mxu0 0
        %605 = vmatpush1.bf16.msra.mxu0 0
        %606 = vmatprep.subr.bf16.mxu0 0
        %607 = vmatpush1.bf16.msra.mxu0 0
        %608 = vmatprep.subr.bf16.mxu0 0
        %609 = vmatpush1.bf16.msra.mxu0 %v592
        %610 = vmatprep.subr.bf16.mxu0 0
        %611 = vmatpush2.bf16.msra.mxu0 0
        %612 = vmatprep.subr.bf16.mxu0 0
        %613 = vmatpush2.bf16.msra.mxu0 0
        %614 = vmatprep.subr.bf16.mxu0 0
        %615 = vmatpush2.bf16.msra.mxu0 0
        %616 = vmatprep.subr.bf16.mxu0 0
        %617 = vmatpush2.bf16.msra.mxu0 0
        %618 = vmatprep.subr.bf16.mxu0 0
        %619 = vmatpush2.bf16.msra.mxu0 0
        %620 = vmatprep.subr.bf16.mxu0 0
        %621 = vmatpush2.bf16.msra.mxu0 0
        %622 = vmatprep.subr.bf16.mxu0 0
        %623 = vmatpush2.bf16.msra.mxu0 0
        %624 = vmatprep.subr.bf16.mxu0 0
        %625 = vmatpush2.bf16.msra.mxu0 0
        %626 = vmatprep.mubr.bf16.mxu0 0
        %627 = vmatmul.mubr.bf16.gmra.mxu0 %v544
        %v628 = vpop.f32.mrf.mxu0
        %v629 = vadd.f32 0.0, %v628
        %v630 = vpop.f32.mrf.mxu0
        %v631 = vpop.f32.mrf.mxu0
        %v632 = vadd.f32 0.0, %v631
        %v633 = vpop.f32.mrf.mxu0
        %634 = vmatprep.mubr.bf16.mxu0 0
        %635 = vmatmul.mubr.bf16.gmra.mxu0 %v547
        %v636 = vpop.f32.mrf.mxu0
        %v637 = vadd.f32 0.0, %v636
        %v638 = vpop.f32.mrf.mxu0
        %v639 = vpop.f32.mrf.mxu0
        %v640 = vadd.f32 0.0, %v639
        %v641 = vpop.f32.mrf.mxu0
        %642 = vmatprep.mubr.bf16.mxu0 0
        %643 = vmatmul.mubr.bf16.gmra.mxu0 %v550
        %v644 = vpop.f32.mrf.mxu0
        %v645 = vadd.f32 0.0, %v644
        %v646 = vpop.f32.mrf.mxu0
        %v647 = vpop.f32.mrf.mxu0
        %v648 = vadd.f32 0.0, %v647
        %v649 = vpop.f32.mrf.mxu0
        %650 = vmatprep.mubr.bf16.mxu0 0
        %651 = vmatmul.mubr.bf16.gmra.mxu0 %v553
        %v652 = vpop.f32.mrf.mxu0
        %v653 = vadd.f32 0.0, %v652
        %v654 = vpop.f32.mrf.mxu0
        %v655 = vpop.f32.mrf.mxu0
        %v656 = vadd.f32 0.0, %v655
        %v657 = vpop.f32.mrf.mxu0
        %658 = vmatprep.mubr.bf16.mxu0 0
        %659 = vmatmul.mubr.bf16.gmra.mxu0 %v556
        %v660 = vpop.f32.mrf.mxu0
        %v661 = vadd.f32 0.0, %v660
        %v662 = vpop.f32.mrf.mxu0
        %v663 = vpop.f32.mrf.mxu0
        %v664 = vadd.f32 0.0, %v663
        %v665 = vpop.f32.mrf.mxu0
        %666 = vmatprep.mubr.bf16.mxu0 0
        %667 = vmatmul.mubr.bf16.gmra.mxu0 %v559
        %v668 = vpop.f32.mrf.mxu0
        %v669 = vadd.f32 0.0, %v668
        %v670 = vpop.f32.mrf.mxu0
        %v671 = vpop.f32.mrf.mxu0
        %v672 = vadd.f32 0.0, %v671
        %v673 = vpop.f32.mrf.mxu0
        %674 = vmatprep.mubr.bf16.mxu0 0
        %675 = vmatmul.mubr.bf16.gmra.mxu0 %v562
        %v676 = vpop.f32.mrf.mxu0
        %v677 = vadd.f32 0.0, %v676
        %v678 = vpop.f32.mrf.mxu0
        %v679 = vpop.f32.mrf.mxu0
        %v680 = vadd.f32 0.0, %v679
        %v681 = vpop.f32.mrf.mxu0
        %682 = vmatprep.mubr.bf16.mxu0 0
        %683 = vmatmul.mubr.bf16.gmra.mxu0 %v565
        %v684 = vpop.f32.mrf.mxu0
        %v685 = vadd.f32 0.0, %v684
        %v686 = vpop.f32.mrf.mxu0
        %v687 = vpop.f32.mrf.mxu0
        %v688 = vadd.f32 0.0, %v687
        %v689 = vpop.f32.mrf.mxu0
        %690 = vmatprep.mubr.bf16.mxu0 0
        %691 = vmatmul.mubr.bf16.gmra.mxu0 %v568
        %v692 = vpop.f32.mrf.mxu0
        %v693 = vadd.f32 0.0, %v692
        %v694 = vpop.f32.mrf.mxu0
        %v695 = vpop.f32.mrf.mxu0
        %v696 = vadd.f32 0.0, %v695
        %v697 = vpop.f32.mrf.mxu0
        %698 = vmatprep.mubr.bf16.mxu0 0
        %699 = vmatmul.mubr.bf16.gmra.mxu0 %v571
        %v700 = vpop.f32.mrf.mxu0
        %v701 = vadd.f32 0.0, %v700
        %v702 = vpop.f32.mrf.mxu0
        %v703 = vpop.f32.mrf.mxu0
        %v704 = vadd.f32 0.0, %v703
        %v705 = vpop.f32.mrf.mxu0
        %706 = vmatprep.mubr.bf16.mxu0 0
        %707 = vmatmul.mubr.bf16.gmra.mxu0 %v574
        %v708 = vpop.f32.mrf.mxu0
        %v709 = vadd.f32 0.0, %v708
        %v710 = vpop.f32.mrf.mxu0
        %v711 = vpop.f32.mrf.mxu0
        %v712 = vadd.f32 0.0, %v711
        %v713 = vpop.f32.mrf.mxu0
        %714 = vmatprep.mubr.bf16.mxu0 0
        %715 = vmatmul.mubr.bf16.gmra.mxu0 %v577
        %v716 = vpop.f32.mrf.mxu0
        %v717 = vadd.f32 0.0, %v716
        %v718 = vpop.f32.mrf.mxu0
        %v719 = vpop.f32.mrf.mxu0
        %v720 = vadd.f32 0.0, %v719
        %v721 = vpop.f32.mrf.mxu0
        %722 = vmatprep.mubr.bf16.mxu0 0
        %723 = vmatmul.mubr.bf16.gmra.mxu0 %v580
        %v724 = vpop.f32.mrf.mxu0
        %v725 = vadd.f32 0.0, %v724
        %v726 = vpop.f32.mrf.mxu0
        %v727 = vpop.f32.mrf.mxu0
        %v728 = vadd.f32 0.0, %v727
        %v729 = vpop.f32.mrf.mxu0
        %730 = vmatprep.mubr.bf16.mxu0 0
        %731 = vmatmul.mubr.bf16.gmra.mxu0 %v583
        %v732 = vpop.f32.mrf.mxu0
        %v733 = vadd.f32 0.0, %v732
        %v734 = vpop.f32.mrf.mxu0
        %v735 = vpop.f32.mrf.mxu0
        %v736 = vadd.f32 0.0, %v735
        %v737 = vpop.f32.mrf.mxu0
        %738 = vmatprep.mubr.bf16.mxu0 0
        %739 = vmatmul.mubr.bf16.gmra.mxu0 %v586
        %v740 = vpop.f32.mrf.mxu0
        %v741 = vadd.f32 0.0, %v740
        %v742 = vpop.f32.mrf.mxu0
        %v743 = vpop.f32.mrf.mxu0
        %v744 = vadd.f32 0.0, %v743
        %v745 = vpop.f32.mrf.mxu0
        %746 = vmatprep.mubr.bf16.mxu0 0
        %747 = vmatmul.mubr.bf16.gmra.mxu0 %v589
        %v748 = vpop.f32.mrf.mxu0
        %v749 = vadd.f32 0.0, %v748
        %v750 = vpop.f32.mrf.mxu0
        %v751 = vpop.f32.mrf.mxu0
        %v752 = vadd.f32 0.0, %v751
        %v753 = vpop.f32.mrf.mxu0
        %754 = vdwg.mxu0
        %v755 = vmax.f32 %v629, %v645
        %v756 = vmax.f32 %v632, %v648
        %v757 = vmax.f32 %v637, %v653
        %v758 = vmax.f32 %v640, %v656
        %v759 = vmax.f32 %v755, %v661
        %v760 = vmax.f32 %v756, %v664
        %v761 = vmax.f32 %v757, %v669
        %v762 = vmax.f32 %v758, %v672
        %v763 = vmax.f32 %v759, %v677
        %v764 = vmax.f32 %v760, %v680
        %v765 = vmax.f32 %v761, %v685
        %v766 = vmax.f32 %v762, %v688
        %v767 = vmax.f32 %v763, %v693
        %v768 = vmax.f32 %v764, %v696
        %v769 = vmax.f32 %v765, %v701
        %v770 = vmax.f32 %v766, %v704
        %v771 = vmax.f32 %v767, %v709
        %v772 = vmax.f32 %v768, %v712
        %v773 = vmax.f32 %v769, %v717
        %v774 = vmax.f32 %v770, %v720
        %v775 = vmax.f32 %v771, %v725
        %v776 = vmax.f32 %v772, %v728
        %v777 = vmax.f32 %v773, %v733
        %v778 = vmax.f32 %v774, %v736
        %v779 = vmax.f32 %v775, %v741
        %v780 = vmax.f32 %v776, %v744
        %v781 = vmax.f32 %v777, %v749
        %v782 = vmax.f32 %v778, %v752
        %v783 = vmax.f32 %v779, %v780
        %v784 = vmax.f32 %v781, %v782
        %v785 = vmax.f32 %v783, %v784
        %v786 = vrot.slane %v785, 4
        %v787 = vmax.f32 %v785, %v786
        %v788 = vrot.slane %v787, 2
        %v789 = vmax.f32 %v787, %v788
        %v790 = vrot.slane %v789, 1
        %v791 = vmax.f32 %v789, %v790
        %v792 = vsub.f32 %v629, %v791
        %v793 = vsub.f32 %v632, %v791
        %v794 = vsub.f32 %v637, %v791
        %v795 = vsub.f32 %v640, %v791
        %v796 = vsub.f32 %v645, %v791
        %v797 = vsub.f32 %v648, %v791
        %v798 = vsub.f32 %v653, %v791
        %v799 = vsub.f32 %v656, %v791
        %v800 = vsub.f32 %v661, %v791
        %v801 = vsub.f32 %v664, %v791
        %v802 = vsub.f32 %v669, %v791
        %v803 = vsub.f32 %v672, %v791
        %v804 = vsub.f32 %v677, %v791
        %v805 = vsub.f32 %v680, %v791
        %v806 = vsub.f32 %v685, %v791
        %v807 = vsub.f32 %v688, %v791
        %v808 = vsub.f32 %v693, %v791
        %v809 = vsub.f32 %v696, %v791
        %v810 = vsub.f32 %v701, %v791
        %v811 = vsub.f32 %v704, %v791
        %v812 = vsub.f32 %v709, %v791
        %v813 = vsub.f32 %v712, %v791
        %v814 = vsub.f32 %v717, %v791
        %v815 = vsub.f32 %v720, %v791
        %v816 = vsub.f32 %v725, %v791
        %v817 = vsub.f32 %v728, %v791
        %v818 = vsub.f32 %v733, %v791
        %v819 = vsub.f32 %v736, %v791
        %v820 = vsub.f32 %v741, %v791
        %v821 = vsub.f32 %v744, %v791
        %v822 = vsub.f32 %v749, %v791
        %v823 = vsub.f32 %v752, %v791
        %v824 = vpack.c.bf16 %v793, %v792
        %v825 = vpack.c.bf16 %v795, %v794
        %v826 = vpack.c.bf16 %v797, %v796
        %v827 = vpack.c.bf16 %v799, %v798
        %v828 = vpack.c.bf16 %v801, %v800
        %v829 = vpack.c.bf16 %v803, %v802
        %v830 = vpack.c.bf16 %v805, %v804
        %v831 = vpack.c.bf16 %v807, %v806
        %v832 = vpack.c.bf16 %v809, %v808
        %v833 = vpack.c.bf16 %v811, %v810
        %v834 = vpack.c.bf16 %v813, %v812
        %v835 = vpack.c.bf16 %v815, %v814
        %v836 = vpack.c.bf16 %v817, %v816
        %v837 = vpack.c.bf16 %v819, %v818
        %v838 = vpack.c.bf16 %v821, %v820
        %v839 = vpack.c.bf16 %v823, %v822
        %v841 = vmul.bf16 %v824, 1069105081
        %v842 = vpow.bf16.pop %v841
        %v844 = vmul.bf16 %v825, 1069105081
        %v845 = vpow.bf16.pop %v844
        %v847 = vmul.bf16 %v826, 1069105081
        %v848 = vpow.bf16.pop %v847
        %v850 = vmul.bf16 %v827, 1069105081
        %v851 = vpow.bf16.pop %v850
        %v853 = vmul.bf16 %v828, 1069105081
        %v854 = vpow.bf16.pop %v853
        %v856 = vmul.bf16 %v829, 1069105081
        %v857 = vpow.bf16.pop %v856
        %v859 = vmul.bf16 %v830, 1069105081
        %v860 = vpow.bf16.pop %v859
        %v862 = vmul.bf16 %v831, 1069105081
        %v863 = vpow.bf16.pop %v862
        %v865 = vmul.bf16 %v832, 1069105081
        %v866 = vpow.bf16.pop %v865
        %v868 = vmul.bf16 %v833, 1069105081
        %v869 = vpow.bf16.pop %v868
        %v871 = vmul.bf16 %v834, 1069105081
        %v872 = vpow.bf16.pop %v871
        %v874 = vmul.bf16 %v835, 1069105081
        %v875 = vpow.bf16.pop %v874
        %v877 = vmul.bf16 %v836, 1069105081
        %v878 = vpow.bf16.pop %v877
        %v880 = vmul.bf16 %v837, 1069105081
        %v881 = vpow.bf16.pop %v880
        %v883 = vmul.bf16 %v838, 1069105081
        %v884 = vpow.bf16.pop %v883
        %v886 = vmul.bf16 %v839, 1069105081
        %v887 = vpow.bf16.pop %v886
        %v888 = vunpack.c.l.bf16 %v842
        %v889 = vunpack.c.h.bf16 %v842
        %v890 = vunpack.c.l.bf16 %v845
        %v891 = vunpack.c.h.bf16 %v845
        %v892 = vunpack.c.l.bf16 %v848
        %v893 = vunpack.c.h.bf16 %v848
        %v894 = vunpack.c.l.bf16 %v851
        %v895 = vunpack.c.h.bf16 %v851
        %v896 = vunpack.c.l.bf16 %v854
        %v897 = vunpack.c.h.bf16 %v854
        %v898 = vunpack.c.l.bf16 %v857
        %v899 = vunpack.c.h.bf16 %v857
        %v900 = vunpack.c.l.bf16 %v860
        %v901 = vunpack.c.h.bf16 %v860
        %v902 = vunpack.c.l.bf16 %v863
        %v903 = vunpack.c.h.bf16 %v863
        %v904 = vunpack.c.l.bf16 %v866
        %v905 = vunpack.c.h.bf16 %v866
        %v906 = vunpack.c.l.bf16 %v869
        %v907 = vunpack.c.h.bf16 %v869
        %v908 = vunpack.c.l.bf16 %v872
        %v909 = vunpack.c.h.bf16 %v872
        %v910 = vunpack.c.l.bf16 %v875
        %v911 = vunpack.c.h.bf16 %v875
        %v912 = vunpack.c.l.bf16 %v878
        %v913 = vunpack.c.h.bf16 %v878
        %v914 = vunpack.c.l.bf16 %v881
        %v915 = vunpack.c.h.bf16 %v881
        %v916 = vunpack.c.l.bf16 %v884
        %v917 = vunpack.c.h.bf16 %v884
        %v918 = vunpack.c.l.bf16 %v887
        %v919 = vunpack.c.h.bf16 %v887
        %v920 = vadd.f32 %v888, %v889
        %v921 = vadd.f32 %v920, %v890
        %v922 = vadd.f32 %v921, %v891
        %v923 = vadd.f32 %v922, %v892
        %v924 = vadd.f32 %v923, %v893
        %v925 = vadd.f32 %v924, %v894
        %v926 = vadd.f32 %v925, %v895
        %v927 = vadd.f32 %v926, %v896
        %v928 = vadd.f32 %v927, %v897
        %v929 = vadd.f32 %v928, %v898
        %v930 = vadd.f32 %v929, %v899
        %v931 = vadd.f32 %v930, %v900
        %v932 = vadd.f32 %v931, %v901
        %v933 = vadd.f32 %v932, %v902
        %v934 = vadd.f32 %v933, %v903
        %v935 = vadd.f32 %v934, %v904
        %v936 = vadd.f32 %v935, %v905
        %v937 = vadd.f32 %v936, %v906
        %v938 = vadd.f32 %v937, %v907
        %v939 = vadd.f32 %v938, %v908
        %v940 = vadd.f32 %v939, %v909
        %v941 = vadd.f32 %v940, %v910
        %v942 = vadd.f32 %v941, %v911
        %v943 = vadd.f32 %v942, %v912
        %v944 = vadd.f32 %v943, %v913
        %v945 = vadd.f32 %v944, %v914
        %v946 = vadd.f32 %v945, %v915
        %v947 = vadd.f32 %v946, %v916
        %v948 = vadd.f32 %v947, %v917
        %v949 = vadd.f32 %v948, %v918
        %v950 = vadd.f32 %v949, %v919
        %v951 = vrot.slane %v950, 4
        %v952 = vadd.f32 %v950, %v951
        %v953 = vrot.slane %v952, 2
        %v954 = vadd.f32 %v952, %v953
        %v955 = vrot.slane %v954, 1
        %v956 = vadd.f32 %v954, %v955
        %v957 = vrcp.pop %v956
        %v958 = vmul.f32 %v498, %v957
        %v959 = vld [vmem:[#allocation3] sm:$0xff]
        %v960 = vld [vmem:[#allocation3 + $0x8] sm:$0xff]
        %v961 = vpack.c.bf16 %v958, %v958
        %962 = vmatprep.subr.bf16.mxu0 0
        %963 = vmatpush1.bf16.xpose.msra.mxu0 %v863
        %964 = vmatprep.subr.bf16.mxu0 0
        %965 = vmatpush1.bf16.xpose.msra.mxu0 %v860
        %966 = vmatprep.subr.bf16.mxu0 0
        %967 = vmatpush1.bf16.xpose.msra.mxu0 %v857
        %968 = vmatprep.subr.bf16.mxu0 0
        %969 = vmatpush1.bf16.xpose.msra.mxu0 %v854
        %970 = vmatprep.subr.bf16.mxu0 0
        %971 = vmatpush1.bf16.xpose.msra.mxu0 %v851
        %972 = vmatprep.subr.bf16.mxu0 0
        %973 = vmatpush1.bf16.xpose.msra.mxu0 %v848
        %974 = vmatprep.subr.bf16.mxu0 0
        %975 = vmatpush1.bf16.xpose.msra.mxu0 %v845
        %976 = vmatprep.subr.bf16.mxu0 0
        %977 = vmatpush1.bf16.xpose.msra.mxu0 %v842
        %978 = vmatprep.subr.bf16.mxu0 0
        %979 = vmatpush2.bf16.xpose.msra.mxu0 %v887
        %980 = vmatprep.subr.bf16.mxu0 0
        %981 = vmatpush2.bf16.xpose.msra.mxu0 %v884
        %982 = vmatprep.subr.bf16.mxu0 0
        %983 = vmatpush2.bf16.xpose.msra.mxu0 %v881
        %984 = vmatprep.subr.bf16.mxu0 0
        %985 = vmatpush2.bf16.xpose.msra.mxu0 %v878
        %986 = vmatprep.subr.bf16.mxu0 0
        %987 = vmatpush2.bf16.xpose.msra.mxu0 %v875
        %988 = vmatprep.subr.bf16.mxu0 0
        %989 = vmatpush2.bf16.xpose.msra.mxu0 %v872
        %990 = vmatprep.subr.bf16.mxu0 0
        %991 = vmatpush2.bf16.xpose.msra.mxu0 %v869
        %992 = vmatprep.subr.bf16.mxu0 0
        %993 = vmatpush2.bf16.xpose.msra.mxu0 %v866
        %994 = vmatprep.mubr.bf16.mxu0 0
        %995 = vmatmul.mubr.bf16.gmra.mxu0 %v961
        %v996 = vpop.f32.mrf.mxu0
        %v997 = vadd.f32 0.0, %v996
        %v998 = vpop.f32.mrf.mxu0
        %v999 = vadd.f32 0.0, %v998
        %v1000 = vpop.f32.mrf.mxu0
        %v1001 = vpop.f32.mrf.mxu0
        %1002 = vdwg.mxu0
        %v1003 = vadd.f32 %v959, %v997
        %v1004 = vadd.f32 %v960, %v999
        %1005 = vst [vmem:[#allocation3] sm:$0xff] %v1003
        %1006 = vst [vmem:[#allocation3 + $0x8] sm:$0xff] %v1004
        %p1007 = scmp.eq.s32.totalorder %s26, 1
        // Predicated region
        $region53: #{tpu_custom_call.1} parent=47 // pred_check
          %p1008 = pneg %p1007
        $region54: #{tpu_custom_call.1} parent=47 // pred_check_branch
          %1010 = sbr.rel (%p1008) target = $region56
        $region55: #{tpu_custom_call.1} parent=47 // pred_region
          %v1011 = vld [vmem:[%s288] sm:$0xff]
          %v1012 = vld [vmem:[%s5] sm:$0xf]
          %v1013 = vld [vmem:[#allocation3] sm:$0xff]
          %v1014 = vld [vmem:[#allocation3 + $0x8] sm:$0xff]
          %v1015 = vld [vmem:[%s6] sm:$0xf]
          %1017 = vset.pattern.permute.xlu0 0
          %1018 = vperm.xlu0 %1017, %v1015
          %v1019 = vpop.permute.xlu0 %1018
          %v1022 = vsel %vm542, %v1012, 0
          %1024 = vmatprep.subr.mxu0 0.0
          %1025 = vmatpush1.msra.mxu0 0.0
          %1026 = vmatprep.subr.mxu0 0.0
          %1027 = vmatpush1.msra.mxu0 0.0
          %1028 = vmatprep.subr.mxu0 0.0
          %1029 = vmatpush1.msra.mxu0 0.0
          %1030 = vmatprep.subr.mxu0 0.0
          %1031 = vmatpush1.msra.mxu0 0.0
          %1032 = vmatprep.subr.mxu0 0.0
          %1033 = vmatpush1.msra.mxu0 0.0
          %1034 = vmatprep.subr.mxu0 0.0
          %1035 = vmatpush1.msra.mxu0 0.0
          %1036 = vmatprep.subr.mxu0 0.0
          %1037 = vmatpush1.msra.mxu0 0.0
          %1038 = vmatprep.subr.mxu0 0.0
          %1039 = vmatpush1.msra.mxu0 0.0
          %1040 = vmatprep.subr.mxu0 0.0
          %1041 = vmatpush1.msra.mxu0 0.0
          %1042 = vmatprep.subr.mxu0 0.0
          %1043 = vmatpush1.msra.mxu0 0.0
          %1044 = vmatprep.subr.mxu0 0.0
          %1045 = vmatpush1.msra.mxu0 0.0
          %1046 = vmatprep.subr.mxu0 0.0
          %1047 = vmatpush1.msra.mxu0 0.0
          %1048 = vmatprep.subr.mxu0 0.0
          %1049 = vmatpush1.msra.mxu0 0.0
          %1050 = vmatprep.subr.mxu0 0.0
          %1051 = vmatpush1.msra.mxu0 0.0
          %1052 = vmatprep.subr.mxu0 0.0
          %1053 = vmatpush1.msra.mxu0 0.0
          %1054 = vmatprep.subr.mxu0 %v1014
          %1055 = vmatpush1.msra.mxu0 %v1013
          %1056 = vmatprep.subr.mxu0 0.0
          %1057 = vmatpush2.msra.mxu0 0.0
          %1058 = vmatprep.subr.mxu0 0.0
          %1059 = vmatpush2.msra.mxu0 0.0
          %1060 = vmatprep.subr.mxu0 0.0
          %1061 = vmatpush2.msra.mxu0 0.0
          %1062 = vmatprep.subr.mxu0 0.0
          %1063 = vmatpush2.msra.mxu0 0.0
          %1064 = vmatprep.subr.mxu0 0.0
          %1065 = vmatpush2.msra.mxu0 0.0
          %1066 = vmatprep.subr.mxu0 0.0
          %1067 = vmatpush2.msra.mxu0 0.0
          %1068 = vmatprep.subr.mxu0 0.0
          %1069 = vmatpush2.msra.mxu0 0.0
          %1070 = vmatprep.subr.mxu0 0.0
          %1071 = vmatpush2.msra.mxu0 0.0
          %1072 = vmatprep.subr.mxu0 0.0
          %1073 = vmatpush2.msra.mxu0 0.0
          %1074 = vmatprep.subr.mxu0 0.0
          %1075 = vmatpush2.msra.mxu0 0.0
          %1076 = vmatprep.subr.mxu0 0.0
          %1077 = vmatpush2.msra.mxu0 0.0
          %1078 = vmatprep.subr.mxu0 0.0
          %1079 = vmatpush2.msra.mxu0 0.0
          %1080 = vmatprep.subr.mxu0 0.0
          %1081 = vmatpush2.msra.mxu0 0.0
          %1082 = vmatprep.subr.mxu0 0.0
          %1083 = vmatpush2.msra.mxu0 0.0
          %1084 = vmatprep.subr.mxu0 0.0
          %1085 = vmatpush2.msra.mxu0 0.0
          %1086 = vmatprep.subr.mxu0 0.0
          %1087 = vmatpush2.msra.mxu0 0.0
          %1088 = vmatprep.mubr.f32.mxu0 0.0
          %1089 = vmatmul.mubr.f32.gmra.mxu0 %v1022
          %v1090 = vpop.f32.mrf.mxu0
          %v1091 = vadd.f32 %v1019, %v1090
          %v1092 = vpop.f32.mrf.mxu0
          %v1093 = vadd.f32 %v1019, %v1092
          %1094 = vdwg.mxu0
          %v1096 = vcombine.high %v1011, %v1011
          %v1098 = vadd.f32 %v1091, %v1011
          %v1099 = vadd.f32 %v1093, %v1096
          %v1102 = vcombine.low %v1098, %v1099
          %1104 = vst [vmem:[%s283] sm:$0xff] %v1102
        $region56: #{tpu_custom_call.1} parent=47 // pred_fallthru
          _
        %s1105 = sand.u32 %s193, 1
        %s1106 = scalar_lea.sflag [#allocation5], %s1105
        %s1107 = sand.u32 %s193, 1
        %s1108 = smul.addr %s1107, 8
        %s1109 = scalar_lea.vmem [#allocation4], %s1108
        // Predicated region
        $region57: #{tpu_custom_call.1} parent=47 // pred_check
          %p1110 = pneg %p203
        $region58: #{tpu_custom_call.1} parent=47 // pred_check_branch
          %1112 = sbr.rel (%p1110) target = $region60
        $region59: #{tpu_custom_call.1} parent=47 // pred_region
          %s1114 = ssub.s32 128, 128
          %1115 = vsyncadd %s1106, %s1114
          %s1116 = smul.addr %s25, 2
          %s1117 = smul.addr %s1116, 64
          %s1118 = scalar_lea.hbm %s7, %s1117
          %s1120 = sshll.u32 %s1109, 4
          %s1121 = int_to_ptr.vmem [resolvable:$true] %s1120
          %1123 = dma.vmem_to_hbm [thread:$0]  %s1121, 128, %s1118, %s1106
        $region60: #{tpu_custom_call.1} parent=47 // pred_fallthru
          _
      $region48: #{tpu_custom_call.1} parent=5 // pred_fallthru
        _
      %p1124 = scmp.le.s32.totalorder 2, %s16
      // Predicated region
      $region61: #{tpu_custom_call.1} parent=5 // pred_check
        %p1125 = pneg %p1124
      $region62: #{tpu_custom_call.1} parent=5 // pred_check_branch
        %1127 = sbr.rel (%p1125) target = $region64
      $region63: #{tpu_custom_call.1} parent=5 // pred_region
        %s1128 = ssub.s32 %s16, 2
        // Predicated region
        $region65: #{tpu_custom_call.1} parent=63 // pred_check
          %p1129 = pneg %p209
        $region66: #{tpu_custom_call.1} parent=63 // pred_check_branch
          %1131 = sbr.rel (%p1129) target = $region68
        $region67: #{tpu_custom_call.1} parent=63 // pred_region
          %s1132 = sand.u32 %s194, 1
          %s1133 = scalar_lea.sflag [#allocation5], %s1132
          %s1134 = sand.u32 %s194, 1
          %s1135 = smul.addr %s1134, 8
          %s1136 = scalar_lea.vmem [#allocation4], %s1135
          %1137 = dma.done %s1133, 128
        $region68: #{tpu_custom_call.1} parent=63 // pred_fallthru
          _
      $region64: #{tpu_custom_call.1} parent=5 // pred_fallthru
        _
    $region6: #{tpu_custom_call.1} parent=1 // loop_footer
      %s20 = sadd.s32 1, %s16
    $region7: #{tpu_custom_call.1} parent=1 // loop_footer_branch
      %15 = sbr.rel target = $region3
    $region8: #{tpu_custom_call.1} parent=1 // loop_exit
      _
    %1138 = vsyncpa [#allocation5], 1
    %s1139 = scalar_lea.sflag [#allocation5], 1
    %1140 = vsyncpa %s1139, 1

</llo_original>
